<compile_context>
chip_gen: v5e
topology: v5e:2x2
jax: 0.10.0
libtpu: 0.0.40
codegen_flags: <defaults>
</compile_context>

<pallas_src>
import functools

import jax
import jax.numpy as jnp
from jax.experimental import pallas as pl
from jax.experimental.pallas import tpu as pltpu


def _round_up(x, m):
    return ((x + m - 1) // m) * m


@functools.lru_cache(maxsize=1)
def _tpu_budget():
    """Returns (scoped-VMEM target bytes, tensorcore count) with safe fallbacks.

    Fallbacks are the most conservative settings (v7x-sized VMEM, single TC) so
    detection failure can never produce an over-sized tile or a useless split.
    """
    phys_vmem = 64 << 20  # conservative default: v7x per-core VMEM
    cores = 1             # conservative default: v5e / v6e (1 TC per chip)
    try:
        info = pltpu.get_tpu_info()
        v = getattr(info, "vmem_capacity_bytes", None)
        if v:
            phys_vmem = int(v)
        for name in ("num_tensorcores", "tensorcore_count", "num_cores",
                     "cores_per_chip"):
            n = getattr(info, name, None)
            try:
                if n is not None and int(n) > 0:
                    cores = int(n)
                    break
            except (TypeError, ValueError):
                pass
    except Exception:
        pass
    # Scoped-VMEM target: ~48 MiB on a 64 MiB part (v7x), ~96 MiB on 128 MiB
    # parts (v5e / v6e), always leaving headroom under the physical ceiling.
    target = max(32 << 20, min(phys_vmem - (16 << 20), (phys_vmem * 3) // 4))
    return int(target), int(cores)


def _decoder_kernel(z_ref, w1_ref, b1_ref, w2_ref, b2_ref, w3_ref, b3_ref, o_ref):
    # Layer 1: Linear (bf16 MXU operands, f32 accumulate) + bias + ReLU in f32.
    h = jnp.dot(z_ref[...].astype(jnp.bfloat16), w1_ref[...],
                preferred_element_type=jnp.float32)
    h = jnp.maximum(h + b1_ref[...], 0.0)
    # Layer 2: Linear + ReLU.
    h = jnp.dot(h.astype(jnp.bfloat16), w2_ref[...],
                preferred_element_type=jnp.float32)
    h = jnp.maximum(h + b2_ref[...], 0.0)
    # Layer 3 (final): Linear, no activation (PyTorch code strips the last act).
    h = jnp.dot(h.astype(jnp.bfloat16), w3_ref[...],
                preferred_element_type=jnp.float32)
    o_ref[...] = (h + b3_ref[...]).astype(o_ref.dtype)


@jax.jit
def decoder_forward(z, params):
    """Fused Decoder MLP forward.

    z: (B, latent_dim) float32
    params: tuple (w1, b1, w2, b2, w3, b3) with wK: (in, out), bK: (1, out), f32.
    Returns (B, input_dim) float32.
    """
    w1, b1, w2, b2, w3, b3 = params
    B, latent = z.shape
    h1, h2 = w1.shape[1], w2.shape[1]
    out_dim = w3.shape[1]

    vmem_target, n_cores = _tpu_budget()

    # ---- batch-tile selection (all static under jit) ------------------------
    if B <= 8:
        # A block equal to the full (sub-8) batch dim is allowed by the tiling
        # rules; single grid step, no masking needed.
        bb = B
    else:
        # Per-row live VMEM bytes: double-buffered f32 z/out streams, f32
        # intermediates after every layer, bf16 copies of the MXU operands.
        per_row = (8 * latent + 8 * out_dim          # 2x-buffered z / out (f32)
                   + 4 * (h1 + h2 + out_dim)         # f32 intermediates
                   + 2 * (latent + h1 + h2))         # bf16 MXU operand casts
        bb_budget = max(8, ((vmem_target // 2) // max(per_row, 1)) // 8 * 8)
        bb_cap = (B // 8) * 8        # largest sublane-aligned tile <= B
        bb = min(bb_budget, bb_cap)
        num_steps = pl.cdiv(B, bb)
        # Only force a >=2-way split when we actually detected a multi-TC part
        # (v7x megacore); on 1-TC v5e/v6e a forced split is pure overhead.
        if n_cores > 1 and B >= 16:
            num_steps = max(num_steps, n_cores)
        # Rebalance: cover B with num_steps near-equal tiles (boundary block is
        # masked by Pallas) instead of padding B up to a multiple of a fixed bb.
        bb = min(bb_cap, _round_up(pl.cdiv(B, num_steps), 8))

    grid = (pl.cdiv(B, bb),)

    # MXU operands in bf16, cast once here (weights are a few KB — negligible
    # extra traffic). Biases stay f32 so bias add / ReLU run on the f32 VPU path.
    w1b = w1.astype(jnp.bfloat16)
    w2b = w2.astype(jnp.bfloat16)
    w3b = w3.astype(jnp.bfloat16)

    rep = lambda i: (0, 0)  # weights / biases: same (only) block every grid step

    return pl.pallas_call(
        _decoder_kernel,
        out_shape=jax.ShapeDtypeStruct((B, out_dim), z.dtype),
        grid_spec=pltpu.PrefetchScalarGridSpec(
            num_scalar_prefetch=0,
            grid=grid,
            in_specs=[
                pl.BlockSpec((bb, latent), lambda i: (i, 0)),
                pl.BlockSpec(w1b.shape, rep),
                pl.BlockSpec(b1.shape, rep),
                pl.BlockSpec(w2b.shape, rep),
                pl.BlockSpec(b2.shape, rep),
                pl.BlockSpec(w3b.shape, rep),
                pl.BlockSpec(b3.shape, rep),
            ],
            out_specs=pl.BlockSpec((bb, out_dim), lambda i: (i, 0)),
        ),
        compiler_params=pltpu.CompilerParams(
            dimension_semantics=("parallel",),
            vmem_limit_bytes=int(vmem_target),
        ),
    )(z, w1b, b1, w2b, b2, w3b, b3)


def init_decoder_params(key, latent_dim, hidden_sizes, input_dim, dtype=jnp.float32):
    """Deterministic init mirroring nn.Linear shapes (stored transposed)."""
    dims = [latent_dim] + list(hidden_sizes) + [input_dim]
    params = []
    for d_in, d_out in zip(dims[:-1], dims[1:]):
        key, kw, kb = jax.random.split(key, 3)
        bound = 1.0 / (d_in ** 0.5)
        w = jax.random.uniform(kw, (d_in, d_out), dtype, minval=-bound, maxval=bound)
        b = jax.random.uniform(kb, (1, d_out), dtype, minval=-bound, maxval=bound)
        params += [w, b]
    return tuple(params)


def decoder_reference_f32(z, params):
    """Plain-JAX f32 reference of the PyTorch Decoder forward."""
    w1, b1, w2, b2, w3, b3 = params
    h = jnp.maximum(z @ w1 + b1, 0.0)
    h = jnp.maximum(h @ w2 + b2, 0.0)
    return h @ w3 + b3


def decoder_reference_bf16(z, params):
    """Reference matching the kernel's bf16-MXU / f32-accumulate numerics."""
    w1, b1, w2, b2, w3, b3 = params
    bf = jnp.bfloat16
    h = jnp.dot(z.astype(bf), w1.astype(bf), preferred_element_type=jnp.float32) + b1
    h = jnp.maximum(h, 0.0)
    h = jnp.dot(h.astype(bf), w2.astype(bf), preferred_element_type=jnp.float32) + b2
    h = jnp.maximum(h, 0.0)
    return jnp.dot(h.astype(bf), w3.astype(bf), preferred_element_type=jnp.float32) + b3


if __name__ == "__main__":
    # Decoder(latent_dim=8, hidden_sizes=[32, 32], input_dim=16, act=nn.ReLU)
    latent_dim, hidden_sizes, input_dim = 8, [32, 32], 16

    key = jax.random.PRNGKey(0)
    key, kz1, kz2 = jax.random.split(key, 3)
    params = init_decoder_params(key, latent_dim, hidden_sizes, input_dim)

    # Case 1: batch NOT a multiple of 8 -> exercises masked boundary block.
    batch = 100
    z = jax.random.normal(kz1, (batch, latent_dim), dtype=jnp.float32)
    out = jax.block_until_ready(decoder_forward(z, params))
    assert out.shape == (batch, input_dim), out.shape
    ref_bf16 = decoder_reference_bf16(z, params)
    assert jnp.allclose(out, ref_bf16, atol=1e-3, rtol=1e-3), "mismatch vs bf16 reference"
    ref_f32 = decoder_reference_f32(z, params)
    assert jnp.allclose(out, ref_f32, atol=1e-1, rtol=1e-1), "mismatch vs f32 reference"

    # Case 2: larger, 8-aligned batch -> exercises rebalanced multi-step grid.
    batch2 = 600
    z2 = jax.random.normal(kz2, (batch2, latent_dim), dtype=jnp.float32)
    out2 = jax.block_until_ready(decoder_forward(z2, params))
    assert out2.shape == (batch2, input_dim), out2.shape
    ref2 = decoder_reference_bf16(z2, params)
    assert jnp.allclose(out2, ref2, atol=1e-3, rtol=1e-3), "mismatch vs bf16 reference (B=600)"

    print("KERNEL_OK")
</pallas_src>

<mosaic_0001>
module attributes {stable_mosaic.version = 11 : i64} {
  func.func @_decoder_kernel(%arg0: i32, %arg1: memref<56x8xf32, #tpu.memory_space<vmem>>, %arg2: memref<8x32xbf16, #tpu.memory_space<vmem>>, %arg3: memref<1x32xf32, #tpu.memory_space<vmem>>, %arg4: memref<32x32xbf16, #tpu.memory_space<vmem>>, %arg5: memref<1x32xf32, #tpu.memory_space<vmem>>, %arg6: memref<32x16xbf16, #tpu.memory_space<vmem>>, %arg7: memref<1x16xf32, #tpu.memory_space<vmem>>, %arg8: memref<56x16xf32, #tpu.memory_space<vmem>>) attributes {dimension_semantics = [#tpu.dimension_semantics<parallel>], iteration_bounds = array<i64: 2>, scalar_prefetch = 0 : i64, scratch_operands = 0 : i64, tpu.core_type = #tpu.core_type<tc>, window_params = [{transform_indices = @transform_0, window_bounds = array<i64: 56, 8>}, {pipeline_mode = #tpu.pipeline_mode<synchronous>, transform_indices = @transform_1, window_bounds = array<i64: 8, 32>}, {pipeline_mode = #tpu.pipeline_mode<synchronous>, transform_indices = @transform_2, window_bounds = array<i64: 1, 32>}, {pipeline_mode = #tpu.pipeline_mode<synchronous>, transform_indices = @transform_3, window_bounds = array<i64: 32, 32>}, {pipeline_mode = #tpu.pipeline_mode<synchronous>, transform_indices = @transform_4, window_bounds = array<i64: 1, 32>}, {pipeline_mode = #tpu.pipeline_mode<synchronous>, transform_indices = @transform_5, window_bounds = array<i64: 32, 16>}, {pipeline_mode = #tpu.pipeline_mode<synchronous>, transform_indices = @transform_6, window_bounds = array<i64: 1, 16>}, {transform_indices = @transform_7, window_bounds = array<i64: 56, 16>}]} {
    %c0 = arith.constant 0 : index
    %c0_0 = arith.constant 0 : index
    %0 = vector.load %arg1[%c0, %c0_0] : memref<56x8xf32, #tpu.memory_space<vmem>>, vector<56x8xf32>
    %1 = arith.truncf %0 : vector<56x8xf32> to vector<56x8xbf16>
    %c0_1 = arith.constant 0 : index
    %c0_2 = arith.constant 0 : index
    %2 = vector.load %arg2[%c0_1, %c0_2] : memref<8x32xbf16, #tpu.memory_space<vmem>>, vector<8x32xbf16>
    %cst = arith.constant dense<0.000000e+00> : vector<56x32xf32>
    %3 = tpu.matmul %1, %2, %cst {dimension_numbers = #tpu.dot_dimension_numbers<[1], [0], [0], [1], [0, 0, 1, 1], [], []>} : vector<56x8xbf16>, vector<8x32xbf16>, vector<56x32xf32> -> vector<56x32xf32>
    %c0_3 = arith.constant 0 : index
    %c0_4 = arith.constant 0 : index
    %4 = vector.load %arg3[%c0_3, %c0_4] : memref<1x32xf32, #tpu.memory_space<vmem>>, vector<1x32xf32>
    %5 = vector.broadcast %4 : vector<1x32xf32> to vector<56x32xf32>
    %6 = arith.addf %3, %5 : vector<56x32xf32>
    %cst_5 = arith.constant 0.000000e+00 : f32
    %7 = vector.broadcast %cst_5 : f32 to vector<56x32xf32>
    %8 = arith.maximumf %6, %7 : vector<56x32xf32>
    %9 = arith.truncf %8 : vector<56x32xf32> to vector<56x32xbf16>
    %c0_6 = arith.constant 0 : index
    %c0_7 = arith.constant 0 : index
    %10 = vector.load %arg4[%c0_6, %c0_7] : memref<32x32xbf16, #tpu.memory_space<vmem>>, vector<32x32xbf16>
    %cst_8 = arith.constant dense<0.000000e+00> : vector<56x32xf32>
    %11 = tpu.matmul %9, %10, %cst_8 {dimension_numbers = #tpu.dot_dimension_numbers<[1], [0], [0], [1], [0, 0, 1, 1], [], []>} : vector<56x32xbf16>, vector<32x32xbf16>, vector<56x32xf32> -> vector<56x32xf32>
    %c0_9 = arith.constant 0 : index
    %c0_10 = arith.constant 0 : index
    %12 = vector.load %arg5[%c0_9, %c0_10] : memref<1x32xf32, #tpu.memory_space<vmem>>, vector<1x32xf32>
    %13 = vector.broadcast %12 : vector<1x32xf32> to vector<56x32xf32>
    %14 = arith.addf %11, %13 : vector<56x32xf32>
    %cst_11 = arith.constant 0.000000e+00 : f32
    %15 = vector.broadcast %cst_11 : f32 to vector<56x32xf32>
    %16 = arith.maximumf %14, %15 : vector<56x32xf32>
    %17 = arith.truncf %16 : vector<56x32xf32> to vector<56x32xbf16>
    %c0_12 = arith.constant 0 : index
    %c0_13 = arith.constant 0 : index
    %18 = vector.load %arg6[%c0_12, %c0_13] : memref<32x16xbf16, #tpu.memory_space<vmem>>, vector<32x16xbf16>
    %cst_14 = arith.constant dense<0.000000e+00> : vector<56x16xf32>
    %19 = tpu.matmul %17, %18, %cst_14 {dimension_numbers = #tpu.dot_dimension_numbers<[1], [0], [0], [1], [0, 0, 1, 1], [], []>} : vector<56x32xbf16>, vector<32x16xbf16>, vector<56x16xf32> -> vector<56x16xf32>
    %c0_15 = arith.constant 0 : index
    %c0_16 = arith.constant 0 : index
    %20 = vector.load %arg7[%c0_15, %c0_16] : memref<1x16xf32, #tpu.memory_space<vmem>>, vector<1x16xf32>
    %21 = vector.broadcast %20 : vector<1x16xf32> to vector<56x16xf32>
    %22 = arith.addf %19, %21 : vector<56x16xf32>
    %c0_17 = arith.constant 0 : index
    %c0_18 = arith.constant 0 : index
    %23 = vector.load %arg8[%c0_17, %c0_18] : memref<56x16xf32, #tpu.memory_space<vmem>>, vector<56x16xf32>
    tpu.vector_store %arg8[%c0_17, %c0_18], %22 {strides = array<i32>} : memref<56x16xf32, #tpu.memory_space<vmem>>, vector<56x16xf32>,
    return
  }
  func.func @transform_0(%arg0: i32) -> (i32, i32) {
    %c0_i32 = arith.constant 0 : i32
    %c0_i32_0 = arith.constant 0 : i32
    return %arg0, %c0_i32 : i32, i32
  }
  func.func @transform_1(%arg0: i32) -> (i32, i32) {
    %c0_i32 = arith.constant 0 : i32
    %c0_i32_0 = arith.constant 0 : i32
    %c0_i32_1 = arith.constant 0 : i32
    return %c0_i32, %c0_i32_0 : i32, i32
  }
  func.func @transform_2(%arg0: i32) -> (i32, i32) {
    %c0_i32 = arith.constant 0 : i32
    %c0_i32_0 = arith.constant 0 : i32
    %c0_i32_1 = arith.constant 0 : i32
    return %c0_i32, %c0_i32_0 : i32, i32
  }
  func.func @transform_3(%arg0: i32) -> (i32, i32) {
    %c0_i32 = arith.constant 0 : i32
    %c0_i32_0 = arith.constant 0 : i32
    %c0_i32_1 = arith.constant 0 : i32
    return %c0_i32, %c0_i32_0 : i32, i32
  }
  func.func @transform_4(%arg0: i32) -> (i32, i32) {
    %c0_i32 = arith.constant 0 : i32
    %c0_i32_0 = arith.constant 0 : i32
    %c0_i32_1 = arith.constant 0 : i32
    return %c0_i32, %c0_i32_0 : i32, i32
  }
  func.func @transform_5(%arg0: i32) -> (i32, i32) {
    %c0_i32 = arith.constant 0 : i32
    %c0_i32_0 = arith.constant 0 : i32
    %c0_i32_1 = arith.constant 0 : i32
    return %c0_i32, %c0_i32_0 : i32, i32
  }
  func.func @transform_6(%arg0: i32) -> (i32, i32) {
    %c0_i32 = arith.constant 0 : i32
    %c0_i32_0 = arith.constant 0 : i32
    %c0_i32_1 = arith.constant 0 : i32
    return %c0_i32, %c0_i32_0 : i32, i32
  }
  func.func @transform_7(%arg0: i32) -> (i32, i32) {
    %c0_i32 = arith.constant 0 : i32
    %c0_i32_0 = arith.constant 0 : i32
    return %arg0, %c0_i32 : i32, i32
  }
}

</mosaic_0001>

<llo_original>
// kernel: decoder_forward.1
$region0: #{decoder_forward.1}
  #allocation0 [shape = 'u32[]', space=smem, size = 0x4, offset = 0x4, fixed_abs, tag = 'smem constant byte address 0x4 - core index']
  #allocation1 [shape = 'u32[72,128]{1,0:T(1,128)}', space=vmem, size = 0x9000, scoped, tag = 'internal scratch']
  %s0 = inlined_call_operand.vmem [shape: f32[100,8], index: 0, kind: input, shape index: {}]
  %s1 = inlined_call_operand.vmem [shape: bf16[8,32], index: 1, kind: input, shape index: {}]
  %s2 = inlined_call_operand.vmem [shape: f32[1,32], index: 2, kind: input, shape index: {}]
  %s3 = inlined_call_operand.vmem [shape: bf16[32,32], index: 3, kind: input, shape index: {}]
  %s4 = inlined_call_operand.vmem [shape: f32[1,32], index: 4, kind: input, shape index: {}]
  %s5 = inlined_call_operand.vmem [shape: bf16[32,16], index: 5, kind: input, shape index: {}]
  %s6 = inlined_call_operand.vmem [shape: f32[1,16], index: 6, kind: input, shape index: {}]
  %s7 = inlined_call_operand.vmem [shape: f32[100,16], index: 7, kind: output, shape index: {}]
  %s8 = sld [smem:[#allocation0]]
  $region109: #{decoder_forward.1} parent=0
    _
  %s10 = ssub.s32 1, %s8
  %s11 = scalar_select 0, %s10, %s8
  $region1: #{decoder_forward.1} parent=0
    #allocation2 [shape = 'u8[57344]{0}', space=vmem, size = 0xe000, scoped, tag = 'output window, operand 0']
    loop: start=0, step=1, limit=4
    $region2: #{decoder_forward.1} parent=1 // loop_pre_header
      _
    $region3: #{decoder_forward.1} parent=1 // loop_header
      %s13 = sphi 0, %s17
      %p14 = scmp.ge.s32.totalorder %s13, 4
      %s23 = sphi 0, %s25
      %s26 = sphi 0, %s23
      %s27 = sphi 0, %s26
      %s43 = sphi 0, %s27
      %s47 = sphi 0, %s47
      %s49 = sphi 0, %s47
      %s50 = sphi 0, %s49
      %s64 = sphi 0, %s50
      %s68 = sphi 0, %s68
      %s70 = sphi 0, %s68
      %s71 = sphi 0, %s70
      %s85 = sphi 0, %s71
      %s89 = sphi 0, %s89
      %s91 = sphi 0, %s89
      %s92 = sphi 0, %s91
      %s106 = sphi 0, %s92
      %s110 = sphi 0, %s110
      %s112 = sphi 0, %s110
      %s113 = sphi 0, %s112
      %s127 = sphi 0, %s113
      %s131 = sphi 0, %s131
      %s133 = sphi 0, %s131
      %s134 = sphi 0, %s133
      %s148 = sphi 0, %s134
      %s152 = sphi 0, %s152
      %s154 = sphi 0, %s152
      %s155 = sphi 0, %s154
      %s169 = sphi 0, %s155
      %s175 = sphi 0, %s177
      %s178 = sphi 0, %s175
      %s179 = sphi 0, %s178
      %s195 = sphi 0, %s179
    $region4: #{decoder_forward.1} parent=1 // loop_header_branch
      %16 = sbr.rel (%p14) target = $region8
    $region5: #{decoder_forward.1} parent=1 // loop_body
      %s18 = ssub.s32 %s13, 1
      %s19 = ssub.s32 %s13, 2
      %s20 = sadd.s32 %s13, 1
      %s21 = ssub.s32 %s13, %s20
      %p22 = scmp.eq.s32.totalorder %s21, 0
      %s24 = sadd.s32 %s23, 1
      %s25 = scalar_select %p22, %s23, %s24
      %p28 = pneg %p22
      %p29 = scmp.eq.s32.totalorder %s13, 1
      %p30 = por %p28, %p29
      %p31 = scmp.ne.s32.totalorder %s23, %s26
      %p32 = scmp.eq.s32.totalorder %s13, 0
      %p33 = por %p31, %p32
      %p34 = scmp.ne.s32.totalorder %s23, %s26
      %p35 = scmp.eq.s32.totalorder %s18, 1
      %p36 = por %p34, %p35
      %p37 = scmp.ne.s32.totalorder %s26, %s27
      %p38 = scmp.eq.s32.totalorder %s18, 0
      %p39 = por %p37, %p38
      %p40 = scmp.ne.s32.totalorder %s26, %s27
      %p41 = scmp.eq.s32.totalorder %s19, 1
      %p42 = por %p40, %p41
      %p44 = scmp.ne.s32.totalorder %s27, %s43
      %p45 = scmp.eq.s32.totalorder %s19, 0
      %p46 = por %p44, %p45
      %s48 = sadd.s32 %s47, 1
      %p51 = scmp.eq.s32.totalorder %s13, 1
      %p52 = scmp.ne.s32.totalorder %s47, %s49
      %p53 = scmp.eq.s32.totalorder %s13, 0
      %p54 = por %p52, %p53
      %p55 = scmp.ne.s32.totalorder %s47, %s49
      %p56 = scmp.eq.s32.totalorder %s18, 1
      %p57 = por %p55, %p56
      %p58 = scmp.ne.s32.totalorder %s49, %s50
      %p59 = scmp.eq.s32.totalorder %s18, 0
      %p60 = por %p58, %p59
      %p61 = scmp.ne.s32.totalorder %s49, %s50
      %p62 = scmp.eq.s32.totalorder %s19, 1
      %p63 = por %p61, %p62
      %p65 = scmp.ne.s32.totalorder %s50, %s64
      %p66 = scmp.eq.s32.totalorder %s19, 0
      %p67 = por %p65, %p66
      %s69 = sadd.s32 %s68, 1
      %p72 = scmp.eq.s32.totalorder %s13, 1
      %p73 = scmp.ne.s32.totalorder %s68, %s70
      %p74 = scmp.eq.s32.totalorder %s13, 0
      %p75 = por %p73, %p74
      %p76 = scmp.ne.s32.totalorder %s68, %s70
      %p77 = scmp.eq.s32.totalorder %s18, 1
      %p78 = por %p76, %p77
      %p79 = scmp.ne.s32.totalorder %s70, %s71
      %p80 = scmp.eq.s32.totalorder %s18, 0
      %p81 = por %p79, %p80
      %p82 = scmp.ne.s32.totalorder %s70, %s71
      %p83 = scmp.eq.s32.totalorder %s19, 1
      %p84 = por %p82, %p83
      %p86 = scmp.ne.s32.totalorder %s71, %s85
      %p87 = scmp.eq.s32.totalorder %s19, 0
      %p88 = por %p86, %p87
      %s90 = sadd.s32 %s89, 1
      %p93 = scmp.eq.s32.totalorder %s13, 1
      %p94 = scmp.ne.s32.totalorder %s89, %s91
      %p95 = scmp.eq.s32.totalorder %s13, 0
      %p96 = por %p94, %p95
      %p97 = scmp.ne.s32.totalorder %s89, %s91
      %p98 = scmp.eq.s32.totalorder %s18, 1
      %p99 = por %p97, %p98
      %p100 = scmp.ne.s32.totalorder %s91, %s92
      %p101 = scmp.eq.s32.totalorder %s18, 0
      %p102 = por %p100, %p101
      %p103 = scmp.ne.s32.totalorder %s91, %s92
      %p104 = scmp.eq.s32.totalorder %s19, 1
      %p105 = por %p103, %p104
      %p107 = scmp.ne.s32.totalorder %s92, %s106
      %p108 = scmp.eq.s32.totalorder %s19, 0
      %p109 = por %p107, %p108
      %s111 = sadd.s32 %s110, 1
      %p114 = scmp.eq.s32.totalorder %s13, 1
      %p115 = scmp.ne.s32.totalorder %s110, %s112
      %p116 = scmp.eq.s32.totalorder %s13, 0
      %p117 = por %p115, %p116
      %p118 = scmp.ne.s32.totalorder %s110, %s112
      %p119 = scmp.eq.s32.totalorder %s18, 1
      %p120 = por %p118, %p119
      %p121 = scmp.ne.s32.totalorder %s112, %s113
      %p122 = scmp.eq.s32.totalorder %s18, 0
      %p123 = por %p121, %p122
      %p124 = scmp.ne.s32.totalorder %s112, %s113
      %p125 = scmp.eq.s32.totalorder %s19, 1
      %p126 = por %p124, %p125
      %p128 = scmp.ne.s32.totalorder %s113, %s127
      %p129 = scmp.eq.s32.totalorder %s19, 0
      %p130 = por %p128, %p129
      %s132 = sadd.s32 %s131, 1
      %p135 = scmp.eq.s32.totalorder %s13, 1
      %p136 = scmp.ne.s32.totalorder %s131, %s133
      %p137 = scmp.eq.s32.totalorder %s13, 0
      %p138 = por %p136, %p137
      %p139 = scmp.ne.s32.totalorder %s131, %s133
      %p140 = scmp.eq.s32.totalorder %s18, 1
      %p141 = por %p139, %p140
      %p142 = scmp.ne.s32.totalorder %s133, %s134
      %p143 = scmp.eq.s32.totalorder %s18, 0
      %p144 = por %p142, %p143
      %p145 = scmp.ne.s32.totalorder %s133, %s134
      %p146 = scmp.eq.s32.totalorder %s19, 1
      %p147 = por %p145, %p146
      %p149 = scmp.ne.s32.totalorder %s134, %s148
      %p150 = scmp.eq.s32.totalorder %s19, 0
      %p151 = por %p149, %p150
      %s153 = sadd.s32 %s152, 1
      %p156 = scmp.eq.s32.totalorder %s13, 1
      %p157 = scmp.ne.s32.totalorder %s152, %s154
      %p158 = scmp.eq.s32.totalorder %s13, 0
      %p159 = por %p157, %p158
      %p160 = scmp.ne.s32.totalorder %s152, %s154
      %p161 = scmp.eq.s32.totalorder %s18, 1
      %p162 = por %p160, %p161
      %p163 = scmp.ne.s32.totalorder %s154, %s155
      %p164 = scmp.eq.s32.totalorder %s18, 0
      %p165 = por %p163, %p164
      %p166 = scmp.ne.s32.totalorder %s154, %s155
      %p167 = scmp.eq.s32.totalorder %s19, 1
      %p168 = por %p166, %p167
      %p170 = scmp.ne.s32.totalorder %s155, %s169
      %p171 = scmp.eq.s32.totalorder %s19, 0
      %p172 = por %p170, %p171
      %s173 = ssub.s32 %s13, %s20
      %p174 = scmp.eq.s32.totalorder %s173, 0
      %s176 = sadd.s32 %s175, 1
      %s177 = scalar_select %p174, %s175, %s176
      %p180 = pneg %p174
      %p181 = scmp.eq.s32.totalorder %s13, 1
      %p182 = por %p180, %p181
      %p183 = scmp.ne.s32.totalorder %s175, %s178
      %p184 = scmp.eq.s32.totalorder %s13, 0
      %p185 = por %p183, %p184
      %p186 = scmp.ne.s32.totalorder %s175, %s178
      %p187 = scmp.eq.s32.totalorder %s18, 1
      %p188 = por %p186, %p187
      %p189 = scmp.ne.s32.totalorder %s178, %s179
      %p190 = scmp.eq.s32.totalorder %s18, 0
      %p191 = por %p189, %p190
      %p192 = scmp.ne.s32.totalorder %s178, %s179
      %p193 = scmp.eq.s32.totalorder %s19, 1
      %p194 = por %p192, %p193
      %p196 = scmp.ne.s32.totalorder %s179, %s195
      %p197 = scmp.eq.s32.totalorder %s19, 0
      %p198 = por %p196, %p197
      %p199 = scmp.le.s32.totalorder 1, %s13
      %p200 = scmp.lt.s32.totalorder %s13, 3
      %p201 = pnand %p199, %p200
      %p202 = pneg %p201
      // Predicated region
      $region9: #{decoder_forward.1} parent=5 // pred_check
        _
      $region10: #{decoder_forward.1} parent=5 // pred_check_branch
        %204 = sbr.rel (%p201) target = $region12
      $region11: #{decoder_forward.1} parent=5 // pred_region
        %s205 = ssub.s32 %s13, 1
        // Predicated region
        $region13: #{decoder_forward.1} parent=11 // pred_check
          %p206 = pneg %p60
        $region14: #{decoder_forward.1} parent=11 // pred_check_branch
          %208 = sbr.rel (%p206) target = $region16
        $region15: #{decoder_forward.1} parent=11 // pred_region
          _
        $region16: #{decoder_forward.1} parent=11 // pred_fallthru
          _
        // Predicated region
        $region17: #{decoder_forward.1} parent=11 // pred_check
          %p209 = pneg %p81
        $region18: #{decoder_forward.1} parent=11 // pred_check_branch
          %211 = sbr.rel (%p209) target = $region20
        $region19: #{decoder_forward.1} parent=11 // pred_region
          _
        $region20: #{decoder_forward.1} parent=11 // pred_fallthru
          _
        // Predicated region
        $region21: #{decoder_forward.1} parent=11 // pred_check
          %p212 = pneg %p102
        $region22: #{decoder_forward.1} parent=11 // pred_check_branch
          %214 = sbr.rel (%p212) target = $region24
        $region23: #{decoder_forward.1} parent=11 // pred_region
          _
        $region24: #{decoder_forward.1} parent=11 // pred_fallthru
          _
        // Predicated region
        $region25: #{decoder_forward.1} parent=11 // pred_check
          %p215 = pneg %p123
        $region26: #{decoder_forward.1} parent=11 // pred_check_branch
          %217 = sbr.rel (%p215) target = $region28
        $region27: #{decoder_forward.1} parent=11 // pred_region
          _
        $region28: #{decoder_forward.1} parent=11 // pred_fallthru
          _
        // Predicated region
        $region29: #{decoder_forward.1} parent=11 // pred_check
          %p218 = pneg %p144
        $region30: #{decoder_forward.1} parent=11 // pred_check_branch
          %220 = sbr.rel (%p218) target = $region32
        $region31: #{decoder_forward.1} parent=11 // pred_region
          _
        $region32: #{decoder_forward.1} parent=11 // pred_fallthru
          _
        // Predicated region
        $region33: #{decoder_forward.1} parent=11 // pred_check
          %p221 = pneg %p165
        $region34: #{decoder_forward.1} parent=11 // pred_check_branch
          %223 = sbr.rel (%p221) target = $region36
        $region35: #{decoder_forward.1} parent=11 // pred_region
          _
        $region36: #{decoder_forward.1} parent=11 // pred_fallthru
          _
      $region12: #{decoder_forward.1} parent=5 // pred_fallthru
        _
      %p224 = scmp.lt.s32.totalorder %s13, 2
      // Predicated region
      $region37: #{decoder_forward.1} parent=5 // pred_check
        %p225 = pneg %p224
      $region38: #{decoder_forward.1} parent=5 // pred_check_branch
        %227 = sbr.rel (%p225) target = $region40
      $region39: #{decoder_forward.1} parent=5 // pred_region
        // Predicated region
        $region41: #{decoder_forward.1} parent=39 // pred_check
          %p228 = pneg %p33
        $region42: #{decoder_forward.1} parent=39 // pred_check_branch
          %230 = sbr.rel (%p228) target = $region44
        $region43: #{decoder_forward.1} parent=39 // pred_region
          %s231 = smul.u32 7, %s13
          %s232 = ssub.s32 13, %s231
          %p233 = scmp.lt.s32.totalorder %s232, 7
          %s234 = scalar_select %p233, %s232, 7
          %s235 = smul.u32 8, %s234
          %p236 = scmp.lt.s32.totalorder %s231, 12
          %s237 = scalar_select %p236, %s231, 12
          %s238 = smul.addr %s237, 8
          %s239 = scalar_lea.vmem %s0, %s238
          %s240 = smul.u32 7, %s13
          %s241 = ssub.s32 13, %s240
          %p242 = scmp.lt.s32.totalorder %s241, 7
          %s243 = scalar_select %p242, %s241, 7
          %s244 = smul.u32 8, %s243
        $region44: #{decoder_forward.1} parent=39 // pred_fallthru
          _
      $region40: #{decoder_forward.1} parent=5 // pred_fallthru
        _
      %p245 = scmp.le.s32.totalorder 1, %s13
      %p246 = scmp.lt.s32.totalorder %s13, 3
      %p247 = pnand %p245, %p246
      %p248 = pneg %p247
      // Predicated region
      $region45: #{decoder_forward.1} parent=5 // pred_check
        _
      $region46: #{decoder_forward.1} parent=5 // pred_check_branch
        %250 = sbr.rel (%p247) target = $region48
      $region47: #{decoder_forward.1} parent=5 // pred_region
        %s251 = ssub.s32 %s13, 1
        %s252 = smul.u32 7, %s18
        %s253 = ssub.s32 13, %s252
        %p254 = scmp.lt.s32.totalorder %s253, 7
        %s255 = scalar_select %p254, %s253, 7
        %s256 = smul.u32 8, %s255
        %p257 = scmp.lt.s32.totalorder %s252, 12
        %s258 = scalar_select %p257, %s252, 12
        %s259 = smul.addr %s258, 8
        %s260 = scalar_lea.vmem %s0, %s259
        %p261 = pneg %p39
        %p262 = pneg %p36
        %p263 = pneg %p60
        %p264 = pneg %p57
        %p265 = pneg %p81
        %p266 = pneg %p78
        %p267 = pneg %p102
        %p268 = pneg %p99
        %p269 = pneg %p123
        %p270 = pneg %p120
        %p271 = pneg %p144
        %p272 = pneg %p141
        %p273 = pneg %p165
        %p274 = pneg %p162
        %p275 = pneg %p191
        %p276 = pneg %p188
        %s277 = sand.u32 %s178, 1
        %s278 = sand.u32 %s178, 1
        %s279 = smul.addr %s278, 56
        %s280 = scalar_lea.vmem [#allocation2], %s279
        %s281 = smul.u32 7, %s18
        %s282 = ssub.s32 13, %s281
        %p283 = scmp.lt.s32.totalorder %s282, 7
        %s284 = scalar_select %p283, %s282, 7
        %s285 = smul.u32 8, %s284
        %p286 = scmp.lt.s32.totalorder %s281, 12
        %s287 = scalar_select %p286, %s281, 12
        %s288 = smul.addr %s287, 8
        %s289 = scalar_lea.vmem %s0, %s288
        %s290 = smul.u32 7, %s18
        %s291 = ssub.s32 13, %s290
        %p292 = scmp.lt.s32.totalorder %s291, 7
        %s293 = scalar_select %p292, %s291, 7
        %s294 = smul.u32 8, %s293
        %s295 = smul.u32 7, %s18
        %s296 = ssub.s32 13, %s295
        %p297 = scmp.lt.s32.totalorder %s296, 7
        %s298 = scalar_select %p297, %s296, 7
        %s299 = smul.u32 8, %s298
        %v301 = vld [vmem:[%s289] sm:$0xff]
        %v302 = vld [vmem:[%s289 + $0x8] sm:$0xff]
        %v303 = vld [vmem:[%s289 + $0x10] sm:$0xff]
        %v304 = vld [vmem:[%s289 + $0x18] sm:$0xff]
        %v305 = vld [vmem:[%s289 + $0x20] sm:$0xff]
        %v306 = vld [vmem:[%s289 + $0x28] sm:$0xff]
        %v307 = vld [vmem:[%s289 + $0x30] sm:$0xff]
        %v308 = vpack.c.bf16 %v302, %v301
        %v309 = vpack.c.bf16 %v304, %v303
        %v310 = vpack.c.bf16 %v306, %v305
        %v311 = vpack.c.bf16 %v307, %v307
        %v312 = vld [vmem:[%s1] sm:$0xf]
        %v313 = vld [vmem:[%s2] sm:$0x1]
        %v315 = vperm.slane %v313, 0
        %vm317 = vcmask 64512
        %v319 = vsel %vm317, %v308, 0
        %v322 = vsel %vm317, %v309, 0
        %v325 = vsel %vm317, %v310, 0
        %v328 = vsel %vm317, %v311, 0
        %vm330 = vcmask 1043456
        %v332 = vsel %vm330, %v312, 0
        %334 = vmatpush.bf16.msra.mxu0 0
        %335 = vmatpush.bf16.msra.mxu0 0
        %336 = vmatpush.bf16.msra.mxu0 0
        %337 = vmatpush.bf16.msra.mxu0 0
        %338 = vmatpush.bf16.msra.mxu0 0
        %339 = vmatpush.bf16.msra.mxu0 0
        %340 = vmatpush.bf16.msra.mxu0 0
        %341 = vmatpush.bf16.msra.mxu0 %v332
        %342 = vmatmul.bf16.gmra.mxu0 %v319
        %v343 = vpop.f32.mrf.mxu0
        %v344 = vadd.f32 %v315, %v343
        %v345 = vpop.f32.mrf.mxu0
        %v346 = vadd.f32 %v315, %v345
        %347 = vmatmul.bf16.gmra.mxu0 %v322
        %v348 = vpop.f32.mrf.mxu0
        %v349 = vadd.f32 %v315, %v348
        %v350 = vpop.f32.mrf.mxu0
        %v351 = vadd.f32 %v315, %v350
        %352 = vmatmul.bf16.gmra.mxu0 %v325
        %v353 = vpop.f32.mrf.mxu0
        %v354 = vadd.f32 %v315, %v353
        %v355 = vpop.f32.mrf.mxu0
        %v356 = vadd.f32 %v315, %v355
        %357 = vmatmul.bf16.gmra.mxu0 %v328
        %v358 = vpop.f32.mrf.mxu0
        %v359 = vadd.f32 %v315, %v358
        %v360 = vpop.f32.mrf.mxu0
        %361 = vdwg.mxu0
        %v362 = vmax.f32 %v344, 0.0
        %v363 = vmax.f32 %v346, 0.0
        %v364 = vmax.f32 %v349, 0.0
        %v365 = vmax.f32 %v351, 0.0
        %v366 = vmax.f32 %v354, 0.0
        %v367 = vmax.f32 %v356, 0.0
        %v368 = vmax.f32 %v359, 0.0
        %v369 = vpack.c.bf16 %v363, %v362
        %v370 = vpack.c.bf16 %v365, %v364
        %v371 = vpack.c.bf16 %v367, %v366
        %v372 = vpack.c.bf16 %v368, %v368
        %v373 = vld [vmem:[%s3] sm:$0xf]
        %v374 = vld [vmem:[%s3 + $0x4] sm:$0xf]
        %v375 = vld [vmem:[%s3 + $0x8] sm:$0xf]
        %v376 = vld [vmem:[%s3 + $0xc] sm:$0xf]
        %v377 = vld [vmem:[%s4] sm:$0x1]
        %v379 = vperm.slane %v377, 0
        %v385 = vunpack.c.l.b16 %v373
        %v386 = vunpack.c.l.b16 %v374
        %v387 = vunpack.c.l.b16 %v375
        %v388 = vunpack.c.l.b16 %v376
        %v389 = vpack.c.b16 %v386, %v385
        %v390 = vpack.c.b16 %v388, %v387
        %vm393 = vcmask 261120
        %v395 = vsel %vm393, %v369, 0
        %v398 = vsel %vm393, %v370, 0
        %v401 = vsel %vm393, %v371, 0
        %v404 = vsel %vm393, %v372, 0
        %406 = vmatpush.bf16.msra.mxu0 0
        %407 = vmatpush.bf16.msra.mxu0 0
        %408 = vmatpush.bf16.msra.mxu0 0
        %409 = vmatpush.bf16.msra.mxu0 0
        %410 = vmatpush.bf16.msra.mxu0 0
        %411 = vmatpush.bf16.msra.mxu0 0
        %412 = vmatpush.bf16.msra.mxu0 %v390
        %413 = vmatpush.bf16.msra.mxu0 %v389
        %414 = vmatmul.bf16.gmra.mxu0 %v395
        %v415 = vpop.f32.mrf.mxu0
        %v416 = vadd.f32 %v379, %v415
        %v417 = vpop.f32.mrf.mxu0
        %v418 = vadd.f32 %v379, %v417
        %419 = vmatmul.bf16.gmra.mxu0 %v398
        %v420 = vpop.f32.mrf.mxu0
        %v421 = vadd.f32 %v379, %v420
        %v422 = vpop.f32.mrf.mxu0
        %v423 = vadd.f32 %v379, %v422
        %424 = vmatmul.bf16.gmra.mxu0 %v401
        %v425 = vpop.f32.mrf.mxu0
        %v426 = vadd.f32 %v379, %v425
        %v427 = vpop.f32.mrf.mxu0
        %v428 = vadd.f32 %v379, %v427
        %429 = vmatmul.bf16.gmra.mxu0 %v404
        %v430 = vpop.f32.mrf.mxu0
        %v431 = vadd.f32 %v379, %v430
        %v432 = vpop.f32.mrf.mxu0
        %433 = vdwg.mxu0
        %v434 = vmax.f32 %v416, 0.0
        %v435 = vmax.f32 %v418, 0.0
        %v436 = vmax.f32 %v421, 0.0
        %v437 = vmax.f32 %v423, 0.0
        %v438 = vmax.f32 %v426, 0.0
        %v439 = vmax.f32 %v428, 0.0
        %v440 = vmax.f32 %v431, 0.0
        %v441 = vpack.c.bf16 %v435, %v434
        %v442 = vpack.c.bf16 %v437, %v436
        %v443 = vpack.c.bf16 %v439, %v438
        %v444 = vpack.c.bf16 %v440, %v440
        %v445 = vld [vmem:[%s5] sm:$0xf]
        %v446 = vld [vmem:[%s5 + $0x4] sm:$0xf]
        %v447 = vld [vmem:[%s5 + $0x8] sm:$0xf]
        %v448 = vld [vmem:[%s5 + $0xc] sm:$0xf]
        %v449 = vld [vmem:[%s6] sm:$0x1]
        %v451 = vperm.slane %v449, 0
        %v457 = vunpack.c.l.b16 %v445
        %v458 = vunpack.c.l.b16 %v446
        %v459 = vunpack.c.l.b16 %v447
        %v460 = vunpack.c.l.b16 %v448
        %v461 = vpack.c.b16 %v458, %v457
        %v462 = vpack.c.b16 %v460, %v459
        %v466 = vsel %vm393, %v441, 0
        %v469 = vsel %vm393, %v442, 0
        %v472 = vsel %vm393, %v443, 0
        %v475 = vsel %vm393, %v444, 0
        %477 = vmatpush.bf16.msra.mxu0 0
        %478 = vmatpush.bf16.msra.mxu0 0
        %479 = vmatpush.bf16.msra.mxu0 0
        %480 = vmatpush.bf16.msra.mxu0 0
        %481 = vmatpush.bf16.msra.mxu0 0
        %482 = vmatpush.bf16.msra.mxu0 0
        %483 = vmatpush.bf16.msra.mxu0 %v462
        %484 = vmatpush.bf16.msra.mxu0 %v461
        %485 = vmatmul.bf16.gmra.mxu0 %v466
        %v486 = vpop.f32.mrf.mxu0
        %v487 = vadd.f32 %v451, %v486
        %v488 = vpop.f32.mrf.mxu0
        %v489 = vadd.f32 %v451, %v488
        %490 = vmatmul.bf16.gmra.mxu0 %v469
        %v491 = vpop.f32.mrf.mxu0
        %v492 = vadd.f32 %v451, %v491
        %v493 = vpop.f32.mrf.mxu0
        %v494 = vadd.f32 %v451, %v493
        %495 = vmatmul.bf16.gmra.mxu0 %v472
        %v496 = vpop.f32.mrf.mxu0
        %v497 = vadd.f32 %v451, %v496
        %v498 = vpop.f32.mrf.mxu0
        %v499 = vadd.f32 %v451, %v498
        %500 = vmatmul.bf16.gmra.mxu0 %v475
        %v501 = vpop.f32.mrf.mxu0
        %v502 = vadd.f32 %v451, %v501
        %v503 = vpop.f32.mrf.mxu0
        %504 = vdwg.mxu0
        %vm505 = vcmask 130048
        %506 = vst.msk [vmem:[%s280] sm:$0xff] %vm505, %v487
        %507 = vst.msk [vmem:[%s280 + $0x8] sm:$0xff] %vm505, %v489
        %508 = vst.msk [vmem:[%s280 + $0x10] sm:$0xff] %vm505, %v492
        %509 = vst.msk [vmem:[%s280 + $0x18] sm:$0xff] %vm505, %v494
        %510 = vst.msk [vmem:[%s280 + $0x20] sm:$0xff] %vm505, %v497
        %511 = vst.msk [vmem:[%s280 + $0x28] sm:$0xff] %vm505, %v499
        %512 = vst.msk [vmem:[%s280 + $0x30] sm:$0xff] %vm505, %v502
        %s513 = sand.u32 %s178, 1
        %s514 = sand.u32 %s178, 1
        %s515 = smul.addr %s514, 56
        %s516 = scalar_lea.vmem [#allocation2], %s515
        // Predicated region
        $region49: #{decoder_forward.1} parent=47 // pred_check
          %p517 = pneg %p188
        $region50: #{decoder_forward.1} parent=47 // pred_check_branch
          %519 = sbr.rel (%p517) target = $region52
        $region51: #{decoder_forward.1} parent=47 // pred_region
          %s520 = smul.u32 7, %s18
          %s521 = ssub.s32 13, %s520
          %p522 = scmp.lt.s32.totalorder %s521, 7
          %s523 = scalar_select %p522, %s521, 7
          %s524 = smul.u32 8, %s523
          %p525 = scmp.ne.s32.totalorder 0, %s524
          %s526 = smul.addr %s520, 8
          %s527 = scalar_lea.vmem %s7, %s526
          // Predicated region
          $region53: #{decoder_forward.1} parent=51 // pred_check
            %p528 = pneg %p525
          $region54: #{decoder_forward.1} parent=51 // pred_check_branch
            %530 = sbr.rel (%p528) target = $region56
          $region55: #{decoder_forward.1} parent=51 // pred_region
            // Predicated region
            $region57: #{decoder_forward.1} parent=55 // pred_check
              _
            $region58: #{decoder_forward.1} parent=55 // pred_check_branch
              %532 = sbr.rel (0) target = $region60
            $region59: #{decoder_forward.1} parent=55 // pred_region
              // Predicated region
              $region79: #{decoder_forward.1} parent=59 // pred_check
                _
              $region80: #{decoder_forward.1} parent=59 // pred_check_branch
                %595 = sbr.rel (0) target = $region82
              $region81: #{decoder_forward.1} parent=59 // pred_region
                %s596 = sdiv.u32.pop %s523, 7
                %s597 = srem.u32.pop %s523, 7
                // While loop
                $region83: #{decoder_forward.1} parent=81 // loop_pre_header
                  _
                $region84: #{decoder_forward.1} parent=81 // loop_header
                  %s599 = sphi 0, %s601
                  %p600 = scmp.ge.s32.totalorder %s599, %s596
                  %s604 = sphi 0, %s623
                  %s605 = sphi %s516, %s626
                  %s606 = sphi %s527, %s627
                $region85: #{decoder_forward.1} parent=81 // loop_header_branch
                  %603 = sbr.rel (%p600) target = $region89
                $region86: #{decoder_forward.1} parent=81 // loop_body
                  %v607 = vld [vmem:[%s605] sm:$0xff]
                  %608 = vst [vmem:[%s606] sm:$0xff] %v607
                  %v609 = vld [vmem:[%s605 + $0x8] sm:$0xff]
                  %610 = vst [vmem:[%s606 + $0x8] sm:$0xff] %v609
                  %v611 = vld [vmem:[%s605 + $0x10] sm:$0xff]
                  %612 = vst [vmem:[%s606 + $0x10] sm:$0xff] %v611
                  %v613 = vld [vmem:[%s605 + $0x18] sm:$0xff]
                  %614 = vst [vmem:[%s606 + $0x18] sm:$0xff] %v613
                  %v615 = vld [vmem:[%s605 + $0x20] sm:$0xff]
                  %616 = vst [vmem:[%s606 + $0x20] sm:$0xff] %v615
                  %v617 = vld [vmem:[%s605 + $0x28] sm:$0xff]
                  %618 = vst [vmem:[%s606 + $0x28] sm:$0xff] %v617
                  %v619 = vld [vmem:[%s605 + $0x30] sm:$0xff]
                  %620 = vst [vmem:[%s606 + $0x30] sm:$0xff] %v619
                  %s621 = sadd.s32 1, %s604
                  %p622 = scmp.ge.s32.totalorder %s621, %s596
                  %s623 = scalar_select %p622, 0, %s621
                  %s624 = smul.u32 %s623, 56
                  %s625 = smul.u32 %s623, 56
                  %s626 = scalar_lea.vmem %s516, %s624 [#allocation2]
                  %s627 = scalar_lea.vmem %s527, %s625
                $region87: #{decoder_forward.1} parent=81 // loop_footer
                  %s601 = sadd.s32 %s599, 1
                $region88: #{decoder_forward.1} parent=81 // loop_footer_branch
                  %598 = sbr.rel target = $region84
                $region89: #{decoder_forward.1} parent=81 // loop_exit
                  _
                %s628 = sdiv.u32.pop %s523, 7
                %s629 = srem.u32.pop %s523, 7
                %s630 = smul.u32 %s628, 7
                %s631 = smul.u32 8, %s630
                %s632 = scalar_lea.vmem %s516, %s631 [#allocation2]
                %s633 = smul.u32 8, %s630
                %s634 = scalar_lea.vmem %s527, %s633
                // While loop
                $region90: #{decoder_forward.1} parent=81 // loop_pre_header
                  _
                $region91: #{decoder_forward.1} parent=81 // loop_header
                  %s636 = sphi 0, %s638
                  %p637 = scmp.ge.s32.totalorder %s636, %s629
                  %s641 = sphi 0, %s648
                  %s642 = sphi %s632, %s651
                  %s643 = sphi %s634, %s652
                $region92: #{decoder_forward.1} parent=81 // loop_header_branch
                  %640 = sbr.rel (%p637) target = $region96
                $region93: #{decoder_forward.1} parent=81 // loop_body
                  %v644 = vld [vmem:[%s642] sm:$0xff]
                  %645 = vst [vmem:[%s643] sm:$0xff] %v644
                  %s646 = sadd.s32 1, %s641
                  %p647 = scmp.ge.s32.totalorder %s646, %s629
                  %s648 = scalar_select %p647, 0, %s646
                  %s649 = smul.u32 %s648, 8
                  %s650 = smul.u32 %s648, 8
                  %s651 = scalar_lea.vmem %s632, %s649 [#allocation2]
                  %s652 = scalar_lea.vmem %s634, %s650
                $region94: #{decoder_forward.1} parent=81 // loop_footer
                  %s638 = sadd.s32 %s636, 1
                $region95: #{decoder_forward.1} parent=81 // loop_footer_branch
                  %635 = sbr.rel target = $region91
                $region96: #{decoder_forward.1} parent=81 // loop_exit
                  _
              $region82: #{decoder_forward.1} parent=59 // pred_fallthru
                _
              // Predicated region
              $region97: #{decoder_forward.1} parent=59 // pred_check
                _
              $region98: #{decoder_forward.1} parent=59 // pred_check_branch
                %654 = sbr.rel target = $region100
              $region99: #{decoder_forward.1} parent=59 // pred_region
                _
              $region100: #{decoder_forward.1} parent=59 // pred_fallthru
                _
            $region60: #{decoder_forward.1} parent=55 // pred_fallthru
              _
            // Predicated region
            $region61: #{decoder_forward.1} parent=55 // pred_check
              _
            $region62: #{decoder_forward.1} parent=55 // pred_check_branch
              %534 = sbr.rel target = $region64
            $region63: #{decoder_forward.1} parent=55 // pred_region
              %s536 = ssub.s32 256, 1
              %s537 = sdiv.u32.pop %s523, 7
              %s538 = srem.u32.pop %s523, 7
              // While loop
              $region65: #{decoder_forward.1} parent=63 // loop_pre_header
                _
              $region66: #{decoder_forward.1} parent=63 // loop_header
                %s540 = sphi 0, %s542
                %p541 = scmp.ge.s32.totalorder %s540, %s537
                %s545 = sphi 0, %s564
                %s546 = sphi %s516, %s567
                %s547 = sphi %s527, %s568
              $region67: #{decoder_forward.1} parent=63 // loop_header_branch
                %544 = sbr.rel (%p541) target = $region71
              $region68: #{decoder_forward.1} parent=63 // loop_body
                %v548 = vld [vmem:[%s546] sm:%s536]
                %549 = vst [vmem:[%s547] sm:%s536] %v548
                %v550 = vld [vmem:[%s546 + $0x8] sm:%s536]
                %551 = vst [vmem:[%s547 + $0x8] sm:%s536] %v550
                %v552 = vld [vmem:[%s546 + $0x10] sm:%s536]
                %553 = vst [vmem:[%s547 + $0x10] sm:%s536] %v552
                %v554 = vld [vmem:[%s546 + $0x18] sm:%s536]
                %555 = vst [vmem:[%s547 + $0x18] sm:%s536] %v554
                %v556 = vld [vmem:[%s546 + $0x20] sm:%s536]
                %557 = vst [vmem:[%s547 + $0x20] sm:%s536] %v556
                %v558 = vld [vmem:[%s546 + $0x28] sm:%s536]
                %559 = vst [vmem:[%s547 + $0x28] sm:%s536] %v558
                %v560 = vld [vmem:[%s546 + $0x30] sm:%s536]
                %561 = vst [vmem:[%s547 + $0x30] sm:%s536] %v560
                %s562 = sadd.s32 1, %s545
                %p563 = scmp.ge.s32.totalorder %s562, %s537
                %s564 = scalar_select %p563, 0, %s562
                %s565 = smul.u32 %s564, 56
                %s566 = smul.u32 %s564, 56
                %s567 = scalar_lea.vmem %s516, %s565 [#allocation2]
                %s568 = scalar_lea.vmem %s527, %s566
              $region69: #{decoder_forward.1} parent=63 // loop_footer
                %s542 = sadd.s32 %s540, 1
              $region70: #{decoder_forward.1} parent=63 // loop_footer_branch
                %539 = sbr.rel target = $region66
              $region71: #{decoder_forward.1} parent=63 // loop_exit
                _
              %s569 = sdiv.u32.pop %s523, 7
              %s570 = srem.u32.pop %s523, 7
              %s571 = smul.u32 %s569, 7
              %s572 = smul.u32 8, %s571
              %s573 = scalar_lea.vmem %s516, %s572 [#allocation2]
              %s574 = smul.u32 8, %s571
              %s575 = scalar_lea.vmem %s527, %s574
              // While loop
              $region72: #{decoder_forward.1} parent=63 // loop_pre_header
                _
              $region73: #{decoder_forward.1} parent=63 // loop_header
                %s577 = sphi 0, %s579
                %p578 = scmp.ge.s32.totalorder %s577, %s570
                %s582 = sphi 0, %s589
                %s583 = sphi %s573, %s592
                %s584 = sphi %s575, %s593
              $region74: #{decoder_forward.1} parent=63 // loop_header_branch
                %581 = sbr.rel (%p578) target = $region78
              $region75: #{decoder_forward.1} parent=63 // loop_body
                %v585 = vld [vmem:[%s583] sm:%s536]
                %586 = vst [vmem:[%s584] sm:%s536] %v585
                %s587 = sadd.s32 1, %s582
                %p588 = scmp.ge.s32.totalorder %s587, %s570
                %s589 = scalar_select %p588, 0, %s587
                %s590 = smul.u32 %s589, 8
                %s591 = smul.u32 %s589, 8
                %s592 = scalar_lea.vmem %s573, %s590 [#allocation2]
                %s593 = scalar_lea.vmem %s575, %s591
              $region76: #{decoder_forward.1} parent=63 // loop_footer
                %s579 = sadd.s32 %s577, 1
              $region77: #{decoder_forward.1} parent=63 // loop_footer_branch
                %576 = sbr.rel target = $region73
              $region78: #{decoder_forward.1} parent=63 // loop_exit
                _
            $region64: #{decoder_forward.1} parent=55 // pred_fallthru
              _
          $region56: #{decoder_forward.1} parent=51 // pred_fallthru
            _
          %655 = vnop
        $region52: #{decoder_forward.1} parent=47 // pred_fallthru
          _
      $region48: #{decoder_forward.1} parent=5 // pred_fallthru
        _
      %p656 = scmp.le.s32.totalorder 2, %s13
      // Predicated region
      $region101: #{decoder_forward.1} parent=5 // pred_check
        %p657 = pneg %p656
      $region102: #{decoder_forward.1} parent=5 // pred_check_branch
        %659 = sbr.rel (%p657) target = $region104
      $region103: #{decoder_forward.1} parent=5 // pred_region
        %s660 = ssub.s32 %s13, 2
        // Predicated region
        $region105: #{decoder_forward.1} parent=103 // pred_check
          %p661 = pneg %p194
        $region106: #{decoder_forward.1} parent=103 // pred_check_branch
          %663 = sbr.rel (%p661) target = $region108
        $region107: #{decoder_forward.1} parent=103 // pred_region
          %s664 = sand.u32 %s179, 1
          %s665 = sand.u32 %s179, 1
          %s666 = smul.addr %s665, 56
          %s667 = scalar_lea.vmem [#allocation2], %s666
        $region108: #{decoder_forward.1} parent=103 // pred_fallthru
          _
      $region104: #{decoder_forward.1} parent=5 // pred_fallthru
        _
    $region6: #{decoder_forward.1} parent=1 // loop_footer
      %s17 = sadd.s32 1, %s13
    $region7: #{decoder_forward.1} parent=1 // loop_footer_branch
      %12 = sbr.rel target = $region3
    $region8: #{decoder_forward.1} parent=1 // loop_exit
      _

</llo_original>
